<compile_context>
chip_gen: v7x
topology: tpu7x:2x2x1
jax: 0.10.0
libtpu: 0.0.40
codegen_flags: <defaults>
</compile_context>

<pallas_src>
import jax
import jax.numpy as jnp
from jax import lax
from jax.experimental import pallas as pl
from jax.experimental.pallas import tpu as pltpu


def _round_up(x, m):
    return (x + m - 1) // m * m


def mlp_kernel(x_ref, w1b1_ref, w2b2_ref, yT_ref):
    """y^T = W2 @ relu(W1 @ x^T + b1) + b2 with batch on the lane axis.

    x_ref is the natural [tile_b, in_dim] layout; the 'transpose' happens inside
    dot_general's contraction pattern (no data movement).
    """
    in_dim = x_ref.shape[1]
    hid = w1b1_ref.shape[0]

    x = x_ref[...].astype(jnp.float32)                 # [tile_b, in_dim]

    w1b1 = w1b1_ref[...]                               # [hid, in_dim + 1] (bias folded in)
    w1T = w1b1[:, :in_dim]                             # [hid, in_dim]
    b1 = w1b1[:, in_dim:]                              # [hid, 1] -> broadcast over lanes

    # Contract in_dim of both operands: result is [hid, tile_b] (batch on lanes).
    h = lax.dot_general(
        w1T, x, (((1,), (1,)), ((), ())),
        preferred_element_type=jnp.float32,
        precision=lax.Precision.HIGHEST,
    ) + b1
    h = jnp.maximum(h, 0.0)                            # ReLU (VPU)

    w2b2 = w2b2_ref[...]                               # [out_dim, hid + 1]
    w2T = w2b2[:, :hid]                                # [out_dim, hid]
    b2 = w2b2[:, hid:]                                 # [out_dim, 1]

    y = jnp.dot(w2T, h,
                preferred_element_type=jnp.float32,
                precision=lax.Precision.HIGHEST) + b2
    yT_ref[...] = y.astype(yT_ref.dtype)               # (out_dim, tile_b): lane-dense store


def simple_test_model(x, w1, b1, w2, b2, *, tile_b=None, use_bf16_activations=False,
                      min_pallas_batch=256, force_pallas=False):
    """x: [B, in_dim] f32; w1: [in_dim, hid]; b1: [1, hid]; w2: [hid, out]; b2: [1, out].

    Weights are stored pre-transposed ([in, out]) so this computes
    y = relu(x @ w1 + b1) @ w2 + b2  ==  PyTorch Linear->ReLU->Linear.
    """
    B, in_dim = x.shape
    hid = w1.shape[1]
    out_dim = w2.shape[1]

    # Tiny batches: the pallas_call fixed cost is pure overhead; let XLA fuse it.
    if B < min_pallas_batch and not force_pallas:
        return jnp.maximum(x @ w1 + b1, 0.0) @ w2 + b2

    if tile_b is None:
        b128 = _round_up(B, 128)
        tile_b = min(16384, b128)
        # Keep >=2 grid steps when the batch allows, so the "parallel" batch axis can
        # actually be sharded across v7x's 2 TensorCores (no-op on v5e/v6e).
        if b128 >= 256:
            tile_b = min(tile_b, max(128, (b128 // 2 // 128) * 128))
    b_pad = _round_up(B, tile_b)
    grid = (b_pad // tile_b,)

    # --- wrapper-side plumbing (no transpose of x; pad is a no-op when B % tile_b == 0) ---
    x_in = x if b_pad == B else jnp.pad(x, ((0, b_pad - B), (0, 0)))   # [b_pad, in_dim]
    if use_bf16_activations:
        x_in = x_in.astype(jnp.bfloat16)                               # halves the x HBM read
    w1b1 = jnp.concatenate([w1.T, b1.reshape(1, hid).T], axis=1)       # [hid, in_dim+1]
    w2b2 = jnp.concatenate([w2.T, b2.reshape(1, out_dim).T], axis=1)   # [out_dim, hid+1]

    flops = 2 * b_pad * (in_dim * hid + hid * out_dim)
    bytes_accessed = (x_in.size * x_in.dtype.itemsize
                      + 4 * (w1b1.size + w2b2.size + out_dim * b_pad))

    yT = pl.pallas_call(
        mlp_kernel,
        out_shape=jax.ShapeDtypeStruct((out_dim, b_pad), jnp.float32),
        grid=grid,
        in_specs=[
            pl.BlockSpec((tile_b, in_dim), lambda i: (i, 0)),   # batch-tiled activations
            pl.BlockSpec(w1b1.shape, lambda i: (0, 0)),         # resident packed weights+bias
            pl.BlockSpec(w2b2.shape, lambda i: (0, 0)),
        ],
        out_specs=pl.BlockSpec((out_dim, tile_b), lambda i: (0, i)),
        compiler_params=pltpu.CompilerParams(
            dimension_semantics=("parallel",),                   # lets v7x split batch across 2 TCs
        ),
        cost_estimate=pl.CostEstimate(
            flops=int(flops), transcendentals=0, bytes_accessed=int(bytes_accessed)
        ),
    )(x_in, w1b1, w2b2)

    return yT[:, :B].T                                           # back to [B, out_dim]


def init_params(key, input_dim=10, hidden_dim=5, output_dim=2):
    """Deterministic init mimicking nn.Linear's uniform(-1/sqrt(fan_in), 1/sqrt(fan_in))."""
    k1, k2, k3, k4 = jax.random.split(key, 4)
    bound1 = 1.0 / jnp.sqrt(input_dim)
    bound2 = 1.0 / jnp.sqrt(hidden_dim)
    # Stored already transposed to [in, out] for the wrapper.
    w1 = jax.random.uniform(k1, (input_dim, hidden_dim), jnp.float32, -bound1, bound1)
    b1 = jax.random.uniform(k2, (1, hidden_dim), jnp.float32, -bound1, bound1)
    w2 = jax.random.uniform(k3, (hidden_dim, output_dim), jnp.float32, -bound2, bound2)
    b2 = jax.random.uniform(k4, (1, output_dim), jnp.float32, -bound2, bound2)
    return w1, b1, w2, b2


if __name__ == "__main__":
    input_dim, hidden_dim, output_dim = 10, 5, 2
    batch = 8

    key = jax.random.PRNGKey(0)
    kx, kp = jax.random.split(key)
    x = jax.random.normal(kx, (batch, input_dim), jnp.float32)
    w1, b1, w2, b2 = init_params(kp, input_dim, hidden_dim, output_dim)

    # force_pallas so the kernel path (not the small-batch XLA fallback) is exercised.
    out = jax.block_until_ready(
        simple_test_model(x, w1, b1, w2, b2, force_pallas=True)
    )

    # Sanity check against plain JAX reference.
    ref = jnp.maximum(x @ w1 + b1, 0.0) @ w2 + b2
    assert out.shape == (batch, output_dim)
    max_err = float(jnp.max(jnp.abs(out - ref)))
    assert jnp.allclose(out, ref, atol=1e-5, rtol=1e-5), f"max abs err = {max_err}"

    print("KERNEL_OK")
</pallas_src>

<mosaic_0001>
module attributes {stable_mosaic.version = 11 : i64} {
  func.func @mlp_kernel(%arg0: i32, %arg1: memref<128x10xf32, #tpu.memory_space<vmem>>, %arg2: memref<5x11xf32, #tpu.memory_space<vmem>>, %arg3: memref<2x6xf32, #tpu.memory_space<vmem>>, %arg4: memref<2x128xf32, #tpu.memory_space<vmem>>) attributes {dimension_semantics = [#tpu.dimension_semantics<parallel>], iteration_bounds = array<i64: 1>, scalar_prefetch = 0 : i64, scratch_operands = 0 : i64, tpu.core_type = #tpu.core_type<tc>, window_params = [{transform_indices = @transform_0, window_bounds = array<i64: 128, 10>}, {pipeline_mode = #tpu.pipeline_mode<synchronous>, transform_indices = @transform_1, window_bounds = array<i64: 5, 11>}, {pipeline_mode = #tpu.pipeline_mode<synchronous>, transform_indices = @transform_2, window_bounds = array<i64: 2, 6>}, {transform_indices = @transform_3, window_bounds = array<i64: 2, 128>}]} {
    %c0 = arith.constant 0 : index
    %c0_0 = arith.constant 0 : index
    %0 = vector.load %arg1[%c0, %c0_0] : memref<128x10xf32, #tpu.memory_space<vmem>>, vector<128x10xf32>
    %c0_1 = arith.constant 0 : index
    %c0_2 = arith.constant 0 : index
    %1 = vector.load %arg2[%c0_1, %c0_2] : memref<5x11xf32, #tpu.memory_space<vmem>>, vector<5x11xf32>
    %2 = vector.extract_strided_slice %1 {offsets = [0, 0], sizes = [5, 10], strides = [1, 1]} : vector<5x11xf32> to vector<5x10xf32>
    %3 = vector.extract_strided_slice %1 {offsets = [0, 10], sizes = [5, 1], strides = [1, 1]} : vector<5x11xf32> to vector<5x1xf32>
    %cst = arith.constant dense<0.000000e+00> : vector<5x128xf32>
    %4 = tpu.matmul %2, %0, %cst {dimension_numbers = #tpu.dot_dimension_numbers<[1], [1], [0], [0], [0, 0, 1, 0], [], []>, precision = #tpu.contract_precision<fp32>} : vector<5x10xf32>, vector<128x10xf32>, vector<5x128xf32> -> vector<5x128xf32>
    %5 = vector.broadcast %3 : vector<5x1xf32> to vector<5x128xf32>
    %6 = arith.addf %4, %5 : vector<5x128xf32>
    %cst_3 = arith.constant 0.000000e+00 : f32
    %7 = vector.broadcast %cst_3 : f32 to vector<5x128xf32>
    %8 = arith.maximumf %6, %7 : vector<5x128xf32>
    %c0_4 = arith.constant 0 : index
    %c0_5 = arith.constant 0 : index
    %9 = vector.load %arg3[%c0_4, %c0_5] : memref<2x6xf32, #tpu.memory_space<vmem>>, vector<2x6xf32>
    %10 = vector.extract_strided_slice %9 {offsets = [0, 0], sizes = [2, 5], strides = [1, 1]} : vector<2x6xf32> to vector<2x5xf32>
    %11 = vector.extract_strided_slice %9 {offsets = [0, 5], sizes = [2, 1], strides = [1, 1]} : vector<2x6xf32> to vector<2x1xf32>
    %cst_6 = arith.constant dense<0.000000e+00> : vector<2x128xf32>
    %12 = tpu.matmul %10, %8, %cst_6 {dimension_numbers = #tpu.dot_dimension_numbers<[1], [0], [0], [1], [0, 0, 1, 1], [], []>, precision = #tpu.contract_precision<fp32>} : vector<2x5xf32>, vector<5x128xf32>, vector<2x128xf32> -> vector<2x128xf32>
    %13 = vector.broadcast %11 : vector<2x1xf32> to vector<2x128xf32>
    %14 = arith.addf %12, %13 : vector<2x128xf32>
    %c0_7 = arith.constant 0 : index
    %c0_8 = arith.constant 0 : index
    %15 = vector.load %arg4[%c0_7, %c0_8] : memref<2x128xf32, #tpu.memory_space<vmem>>, vector<2x128xf32>
    tpu.vector_store %arg4[%c0_7, %c0_8], %14 {strides = array<i32>} : memref<2x128xf32, #tpu.memory_space<vmem>>, vector<2x128xf32>,
    return
  }
  func.func @transform_0(%arg0: i32) -> (i32, i32) {
    %c0_i32 = arith.constant 0 : i32
    %c0_i32_0 = arith.constant 0 : i32
    return %arg0, %c0_i32 : i32, i32
  }
  func.func @transform_1(%arg0: i32) -> (i32, i32) {
    %c0_i32 = arith.constant 0 : i32
    %c0_i32_0 = arith.constant 0 : i32
    %c0_i32_1 = arith.constant 0 : i32
    return %c0_i32, %c0_i32_0 : i32, i32
  }
  func.func @transform_2(%arg0: i32) -> (i32, i32) {
    %c0_i32 = arith.constant 0 : i32
    %c0_i32_0 = arith.constant 0 : i32
    %c0_i32_1 = arith.constant 0 : i32
    return %c0_i32, %c0_i32_0 : i32, i32
  }
  func.func @transform_3(%arg0: i32) -> (i32, i32) {
    %c0_i32 = arith.constant 0 : i32
    %c0_i32_0 = arith.constant 0 : i32
    return %c0_i32, %arg0 : i32, i32
  }
}

</mosaic_0001>

<llo_original>
// kernel: tpu_custom_call.1
$region0: #{tpu_custom_call.1}
  #allocation0 [shape = 'u32[]', space=smem, size = 0x4, offset = 0x4, fixed_abs, tag = 'smem constant byte address 0x4 - core index']
  #allocation1 [shape = 'u32[144,128]{1,0:T(1,128)}', space=vmem, size = 0x12000, scoped, tag = 'internal scratch']
  %s0 = inlined_call_operand.vmem [shape: f32[128,10], index: 0, kind: input, shape index: {}]
  %s1 = inlined_call_operand.vmem [shape: f32[5,11], index: 1, kind: input, shape index: {}]
  %s2 = inlined_call_operand.vmem [shape: f32[2,6], index: 2, kind: input, shape index: {}]
  %s3 = inlined_call_operand.hbm [shape: f32[2,128], index: 3, kind: output, shape index: {}]
  %s4 = sld [smem:[#allocation0]]
  $region22: #{tpu_custom_call.1} parent=0
    _
  %s6 = ssub.s32 1, %s4
  %s7 = scalar_select 0, %s6, %s4
  $region1: #{tpu_custom_call.1} parent=0
    #allocation2 [shape = 'u8[1024]{0}', space=vmem, size = 0x400, scoped, tag = 'output window, operand 0, single buffered']
    #allocation3 [shape = 's32[1]{0}', space=sflag, size = 0x4, scoped, tag = 'scoped memory for tpu_custom_call.1']
    %8 = vsyncpa [#allocation3], 0
    // Predicated region
    $region2: #{tpu_custom_call.1} parent=1 // pred_check
      _
    $region3: #{tpu_custom_call.1} parent=1 // pred_check_branch
      %10 = sbr.rel (0) target = $region5
    $region4: #{tpu_custom_call.1} parent=1 // pred_region
      _
    $region5: #{tpu_custom_call.1} parent=1 // pred_fallthru
      _
    // Predicated region
    $region6: #{tpu_custom_call.1} parent=1 // pred_check
      _
    $region7: #{tpu_custom_call.1} parent=1 // pred_check_branch
      %12 = sbr.rel (0) target = $region9
    $region8: #{tpu_custom_call.1} parent=1 // pred_region
      _
    $region9: #{tpu_custom_call.1} parent=1 // pred_fallthru
      _
    // Predicated region
    $region10: #{tpu_custom_call.1} parent=1 // pred_check
      _
    $region11: #{tpu_custom_call.1} parent=1 // pred_check_branch
      %14 = sbr.rel (0) target = $region13
    $region12: #{tpu_custom_call.1} parent=1 // pred_region
      _
    $region13: #{tpu_custom_call.1} parent=1 // pred_fallthru
      _
    %v15 = vld [vmem:[%s0] sm:$0xff]
    %v16 = vld [vmem:[%s0 + $0x8] sm:$0xff]
    %v17 = vld [vmem:[%s0 + $0x10] sm:$0xff]
    %v18 = vld [vmem:[%s0 + $0x18] sm:$0xff]
    %v19 = vld [vmem:[%s0 + $0x20] sm:$0xff]
    %v20 = vld [vmem:[%s0 + $0x28] sm:$0xff]
    %v21 = vld [vmem:[%s0 + $0x30] sm:$0xff]
    %v22 = vld [vmem:[%s0 + $0x38] sm:$0xff]
    %v23 = vld [vmem:[%s0 + $0x40] sm:$0xff]
    %v24 = vld [vmem:[%s0 + $0x48] sm:$0xff]
    %v25 = vld [vmem:[%s0 + $0x50] sm:$0xff]
    %v26 = vld [vmem:[%s0 + $0x58] sm:$0xff]
    %v27 = vld [vmem:[%s0 + $0x60] sm:$0xff]
    %v28 = vld [vmem:[%s0 + $0x68] sm:$0xff]
    %v29 = vld [vmem:[%s0 + $0x70] sm:$0xff]
    %v30 = vld [vmem:[%s0 + $0x78] sm:$0xff]
    %v31 = vld [vmem:[%s1] sm:$0x1f]
    %33 = vset.pattern.permute.xlu0 10
    %34 = vperm.xlu0 %33, %v31
    %v35 = vpop.permute.xlu0 %34
    %vm37 = vcmask 80896
    %v38 = vsel %vm37, %v31, 0
    %v41 = vsel %vm37, %v15, 0
    %v44 = vsel %vm37, %v16, 0
    %v47 = vsel %vm37, %v17, 0
    %v50 = vsel %vm37, %v18, 0
    %v53 = vsel %vm37, %v19, 0
    %v56 = vsel %vm37, %v20, 0
    %v59 = vsel %vm37, %v21, 0
    %v62 = vsel %vm37, %v22, 0
    %v65 = vsel %vm37, %v23, 0
    %v68 = vsel %vm37, %v24, 0
    %v71 = vsel %vm37, %v25, 0
    %v74 = vsel %vm37, %v26, 0
    %v77 = vsel %vm37, %v27, 0
    %v80 = vsel %vm37, %v28, 0
    %v83 = vsel %vm37, %v29, 0
    %v86 = vsel %vm37, %v30, 0
    %88 = vmatprep.subr.mxu0 0.0
    %v89 = vand.u32 %v41, 4294901760
    %90 = vmatpush1.xpose.msra.mxu0 %v89
    %91 = vmatprep.subr.mxu0 0.0
    %v92 = vand.u32 %v44, 4294901760
    %93 = vmatpush1.xpose.msra.mxu0 %v92
    %94 = vmatprep.subr.mxu0 0.0
    %v95 = vand.u32 %v47, 4294901760
    %96 = vmatpush1.xpose.msra.mxu0 %v95
    %97 = vmatprep.subr.mxu0 0.0
    %v98 = vand.u32 %v50, 4294901760
    %99 = vmatpush1.xpose.msra.mxu0 %v98
    %100 = vmatprep.subr.mxu0 0.0
    %v101 = vand.u32 %v53, 4294901760
    %102 = vmatpush1.xpose.msra.mxu0 %v101
    %103 = vmatprep.subr.mxu0 0.0
    %v104 = vand.u32 %v56, 4294901760
    %105 = vmatpush1.xpose.msra.mxu0 %v104
    %106 = vmatprep.subr.mxu0 0.0
    %v107 = vand.u32 %v59, 4294901760
    %108 = vmatpush1.xpose.msra.mxu0 %v107
    %109 = vmatprep.subr.mxu0 0.0
    %v110 = vand.u32 %v62, 4294901760
    %111 = vmatpush1.xpose.msra.mxu0 %v110
    %112 = vmatprep.subr.mxu0 0.0
    %v113 = vand.u32 %v65, 4294901760
    %114 = vmatpush1.xpose.msra.mxu0 %v113
    %115 = vmatprep.subr.mxu0 0.0
    %v116 = vand.u32 %v68, 4294901760
    %117 = vmatpush1.xpose.msra.mxu0 %v116
    %118 = vmatprep.subr.mxu0 0.0
    %v119 = vand.u32 %v71, 4294901760
    %120 = vmatpush1.xpose.msra.mxu0 %v119
    %121 = vmatprep.subr.mxu0 0.0
    %v122 = vand.u32 %v74, 4294901760
    %123 = vmatpush1.xpose.msra.mxu0 %v122
    %124 = vmatprep.subr.mxu0 0.0
    %v125 = vand.u32 %v77, 4294901760
    %126 = vmatpush1.xpose.msra.mxu0 %v125
    %127 = vmatprep.subr.mxu0 0.0
    %v128 = vand.u32 %v80, 4294901760
    %129 = vmatpush1.xpose.msra.mxu0 %v128
    %130 = vmatprep.subr.mxu0 0.0
    %v131 = vand.u32 %v83, 4294901760
    %132 = vmatpush1.xpose.msra.mxu0 %v131
    %133 = vmatprep.subr.mxu0 0.0
    %v134 = vand.u32 %v86, 4294901760
    %135 = vmatpush1.xpose.msra.mxu0 %v134
    %136 = vmatprep.subr.mxu0 0.0
    %137 = vmatpush1.xpose.msra.mxu0 0.0
    %138 = vmatprep.subr.mxu0 0.0
    %139 = vmatpush1.xpose.msra.mxu0 0.0
    %140 = vmatprep.subr.mxu0 0.0
    %141 = vmatpush1.xpose.msra.mxu0 0.0
    %142 = vmatprep.subr.mxu0 0.0
    %143 = vmatpush1.xpose.msra.mxu0 0.0
    %144 = vmatprep.subr.mxu0 0.0
    %145 = vmatpush1.xpose.msra.mxu0 0.0
    %146 = vmatprep.subr.mxu0 0.0
    %147 = vmatpush1.xpose.msra.mxu0 0.0
    %148 = vmatprep.subr.mxu0 0.0
    %149 = vmatpush1.xpose.msra.mxu0 0.0
    %150 = vmatprep.subr.mxu0 0.0
    %151 = vmatpush1.xpose.msra.mxu0 0.0
    %152 = vmatprep.subr.mxu0 0.0
    %153 = vmatpush1.xpose.msra.mxu0 0.0
    %154 = vmatprep.subr.mxu0 0.0
    %155 = vmatpush1.xpose.msra.mxu0 0.0
    %156 = vmatprep.subr.mxu0 0.0
    %157 = vmatpush1.xpose.msra.mxu0 0.0
    %158 = vmatprep.subr.mxu0 0.0
    %159 = vmatpush1.xpose.msra.mxu0 0.0
    %160 = vmatprep.subr.mxu0 0.0
    %161 = vmatpush1.xpose.msra.mxu0 0.0
    %162 = vmatprep.subr.mxu0 0.0
    %163 = vmatpush1.xpose.msra.mxu0 0.0
    %164 = vmatprep.subr.mxu0 0.0
    %165 = vmatpush1.xpose.msra.mxu0 0.0
    %166 = vmatprep.subr.mxu0 0.0
    %167 = vmatpush1.xpose.msra.mxu0 0.0
    %168 = vmatprep.mubr.f32.mxu0 0.0
    %v169 = vand.u32 %v38, 4294901760
    %v170 = vsub.f32 %v38, %v169
    %v171 = vand.u32 %v170, 4294901760
    %v172 = vsub.f32 %v170, %v171
    %v173 = vand.u32 %v172, 4294901760
    %174 = vmatmul.mubr.f32.gmra.mrb[0].mxu0 %v173
    %v175 = vpop.f32.mrb[0].mxu0
    %v176 = vadd.f32 %v35, %v175
    %v177 = vpop.f32.mrb[0].mxu0
    %178 = vdwg.mxu0
    %179 = vmatprep.subr.mxu0 0.0
    %v180 = vand.u32 %v41, 4294901760
    %v181 = vsub.f32 %v41, %v180
    %v182 = vand.u32 %v181, 4294901760
    %v183 = vsub.f32 %v181, %v182
    %v184 = vand.u32 %v183, 4294901760
    %185 = vmatpush1.xpose.msra.mxu0 %v184
    %186 = vmatprep.subr.mxu0 0.0
    %v187 = vand.u32 %v44, 4294901760
    %v188 = vsub.f32 %v44, %v187
    %v189 = vand.u32 %v188, 4294901760
    %v190 = vsub.f32 %v188, %v189
    %v191 = vand.u32 %v190, 4294901760
    %192 = vmatpush1.xpose.msra.mxu0 %v191
    %193 = vmatprep.subr.mxu0 0.0
    %v194 = vand.u32 %v47, 4294901760
    %v195 = vsub.f32 %v47, %v194
    %v196 = vand.u32 %v195, 4294901760
    %v197 = vsub.f32 %v195, %v196
    %v198 = vand.u32 %v197, 4294901760
    %199 = vmatpush1.xpose.msra.mxu0 %v198
    %200 = vmatprep.subr.mxu0 0.0
    %v201 = vand.u32 %v50, 4294901760
    %v202 = vsub.f32 %v50, %v201
    %v203 = vand.u32 %v202, 4294901760
    %v204 = vsub.f32 %v202, %v203
    %v205 = vand.u32 %v204, 4294901760
    %206 = vmatpush1.xpose.msra.mxu0 %v205
    %207 = vmatprep.subr.mxu0 0.0
    %v208 = vand.u32 %v53, 4294901760
    %v209 = vsub.f32 %v53, %v208
    %v210 = vand.u32 %v209, 4294901760
    %v211 = vsub.f32 %v209, %v210
    %v212 = vand.u32 %v211, 4294901760
    %213 = vmatpush1.xpose.msra.mxu0 %v212
    %214 = vmatprep.subr.mxu0 0.0
    %v215 = vand.u32 %v56, 4294901760
    %v216 = vsub.f32 %v56, %v215
    %v217 = vand.u32 %v216, 4294901760
    %v218 = vsub.f32 %v216, %v217
    %v219 = vand.u32 %v218, 4294901760
    %220 = vmatpush1.xpose.msra.mxu0 %v219
    %221 = vmatprep.subr.mxu0 0.0
    %v222 = vand.u32 %v59, 4294901760
    %v223 = vsub.f32 %v59, %v222
    %v224 = vand.u32 %v223, 4294901760
    %v225 = vsub.f32 %v223, %v224
    %v226 = vand.u32 %v225, 4294901760
    %227 = vmatpush1.xpose.msra.mxu0 %v226
    %228 = vmatprep.subr.mxu0 0.0
    %v229 = vand.u32 %v62, 4294901760
    %v230 = vsub.f32 %v62, %v229
    %v231 = vand.u32 %v230, 4294901760
    %v232 = vsub.f32 %v230, %v231
    %v233 = vand.u32 %v232, 4294901760
    %234 = vmatpush1.xpose.msra.mxu0 %v233
    %235 = vmatprep.subr.mxu0 0.0
    %v236 = vand.u32 %v65, 4294901760
    %v237 = vsub.f32 %v65, %v236
    %v238 = vand.u32 %v237, 4294901760
    %v239 = vsub.f32 %v237, %v238
    %v240 = vand.u32 %v239, 4294901760
    %241 = vmatpush1.xpose.msra.mxu0 %v240
    %242 = vmatprep.subr.mxu0 0.0
    %v243 = vand.u32 %v68, 4294901760
    %v244 = vsub.f32 %v68, %v243
    %v245 = vand.u32 %v244, 4294901760
    %v246 = vsub.f32 %v244, %v245
    %v247 = vand.u32 %v246, 4294901760
    %248 = vmatpush1.xpose.msra.mxu0 %v247
    %249 = vmatprep.subr.mxu0 0.0
    %v250 = vand.u32 %v71, 4294901760
    %v251 = vsub.f32 %v71, %v250
    %v252 = vand.u32 %v251, 4294901760
    %v253 = vsub.f32 %v251, %v252
    %v254 = vand.u32 %v253, 4294901760
    %255 = vmatpush1.xpose.msra.mxu0 %v254
    %256 = vmatprep.subr.mxu0 0.0
    %v257 = vand.u32 %v74, 4294901760
    %v258 = vsub.f32 %v74, %v257
    %v259 = vand.u32 %v258, 4294901760
    %v260 = vsub.f32 %v258, %v259
    %v261 = vand.u32 %v260, 4294901760
    %262 = vmatpush1.xpose.msra.mxu0 %v261
    %263 = vmatprep.subr.mxu0 0.0
    %v264 = vand.u32 %v77, 4294901760
    %v265 = vsub.f32 %v77, %v264
    %v266 = vand.u32 %v265, 4294901760
    %v267 = vsub.f32 %v265, %v266
    %v268 = vand.u32 %v267, 4294901760
    %269 = vmatpush1.xpose.msra.mxu0 %v268
    %270 = vmatprep.subr.mxu0 0.0
    %v271 = vand.u32 %v80, 4294901760
    %v272 = vsub.f32 %v80, %v271
    %v273 = vand.u32 %v272, 4294901760
    %v274 = vsub.f32 %v272, %v273
    %v275 = vand.u32 %v274, 4294901760
    %276 = vmatpush1.xpose.msra.mxu0 %v275
    %277 = vmatprep.subr.mxu0 0.0
    %v278 = vand.u32 %v83, 4294901760
    %v279 = vsub.f32 %v83, %v278
    %v280 = vand.u32 %v279, 4294901760
    %v281 = vsub.f32 %v279, %v280
    %v282 = vand.u32 %v281, 4294901760
    %283 = vmatpush1.xpose.msra.mxu0 %v282
    %284 = vmatprep.subr.mxu0 0.0
    %v285 = vand.u32 %v86, 4294901760
    %v286 = vsub.f32 %v86, %v285
    %v287 = vand.u32 %v286, 4294901760
    %v288 = vsub.f32 %v286, %v287
    %v289 = vand.u32 %v288, 4294901760
    %290 = vmatpush1.xpose.msra.mxu0 %v289
    %291 = vmatprep.subr.mxu0 0.0
    %292 = vmatpush1.xpose.msra.mxu0 0.0
    %293 = vmatprep.subr.mxu0 0.0
    %294 = vmatpush1.xpose.msra.mxu0 0.0
    %295 = vmatprep.subr.mxu0 0.0
    %296 = vmatpush1.xpose.msra.mxu0 0.0
    %297 = vmatprep.subr.mxu0 0.0
    %298 = vmatpush1.xpose.msra.mxu0 0.0
    %299 = vmatprep.subr.mxu0 0.0
    %300 = vmatpush1.xpose.msra.mxu0 0.0
    %301 = vmatprep.subr.mxu0 0.0
    %302 = vmatpush1.xpose.msra.mxu0 0.0
    %303 = vmatprep.subr.mxu0 0.0
    %304 = vmatpush1.xpose.msra.mxu0 0.0
    %305 = vmatprep.subr.mxu0 0.0
    %306 = vmatpush1.xpose.msra.mxu0 0.0
    %307 = vmatprep.subr.mxu0 0.0
    %308 = vmatpush1.xpose.msra.mxu0 0.0
    %309 = vmatprep.subr.mxu0 0.0
    %310 = vmatpush1.xpose.msra.mxu0 0.0
    %311 = vmatprep.subr.mxu0 0.0
    %312 = vmatpush1.xpose.msra.mxu0 0.0
    %313 = vmatprep.subr.mxu0 0.0
    %314 = vmatpush1.xpose.msra.mxu0 0.0
    %315 = vmatprep.subr.mxu0 0.0
    %316 = vmatpush1.xpose.msra.mxu0 0.0
    %317 = vmatprep.subr.mxu0 0.0
    %318 = vmatpush1.xpose.msra.mxu0 0.0
    %319 = vmatprep.subr.mxu0 0.0
    %320 = vmatpush1.xpose.msra.mxu0 0.0
    %321 = vmatprep.subr.mxu0 0.0
    %322 = vmatpush1.xpose.msra.mxu0 0.0
    %323 = vmatprep.mubr.f32.mxu0 0.0
    %v324 = vand.u32 %v38, 4294901760
    %325 = vmatmul.mubr.f32.gmra.mrb[0].mxu0 %v324
    %v326 = vpop.f32.mrb[0].mxu0
    %v327 = vadd.f32 %v176, %v326
    %v328 = vpop.f32.mrb[0].mxu0
    %329 = vdwg.mxu0
    %330 = vmatprep.subr.mxu0 0.0
    %v331 = vand.u32 %v41, 4294901760
    %v332 = vsub.f32 %v41, %v331
    %333 = vmatpush1.xpose.msra.mxu0 %v332
    %334 = vmatprep.subr.mxu0 0.0
    %v335 = vand.u32 %v44, 4294901760
    %v336 = vsub.f32 %v44, %v335
    %337 = vmatpush1.xpose.msra.mxu0 %v336
    %338 = vmatprep.subr.mxu0 0.0
    %v339 = vand.u32 %v47, 4294901760
    %v340 = vsub.f32 %v47, %v339
    %341 = vmatpush1.xpose.msra.mxu0 %v340
    %342 = vmatprep.subr.mxu0 0.0
    %v343 = vand.u32 %v50, 4294901760
    %v344 = vsub.f32 %v50, %v343
    %345 = vmatpush1.xpose.msra.mxu0 %v344
    %346 = vmatprep.subr.mxu0 0.0
    %v347 = vand.u32 %v53, 4294901760
    %v348 = vsub.f32 %v53, %v347
    %349 = vmatpush1.xpose.msra.mxu0 %v348
    %350 = vmatprep.subr.mxu0 0.0
    %v351 = vand.u32 %v56, 4294901760
    %v352 = vsub.f32 %v56, %v351
    %353 = vmatpush1.xpose.msra.mxu0 %v352
    %354 = vmatprep.subr.mxu0 0.0
    %v355 = vand.u32 %v59, 4294901760
    %v356 = vsub.f32 %v59, %v355
    %357 = vmatpush1.xpose.msra.mxu0 %v356
    %358 = vmatprep.subr.mxu0 0.0
    %v359 = vand.u32 %v62, 4294901760
    %v360 = vsub.f32 %v62, %v359
    %361 = vmatpush1.xpose.msra.mxu0 %v360
    %362 = vmatprep.subr.mxu0 0.0
    %v363 = vand.u32 %v65, 4294901760
    %v364 = vsub.f32 %v65, %v363
    %365 = vmatpush1.xpose.msra.mxu0 %v364
    %366 = vmatprep.subr.mxu0 0.0
    %v367 = vand.u32 %v68, 4294901760
    %v368 = vsub.f32 %v68, %v367
    %369 = vmatpush1.xpose.msra.mxu0 %v368
    %370 = vmatprep.subr.mxu0 0.0
    %v371 = vand.u32 %v71, 4294901760
    %v372 = vsub.f32 %v71, %v371
    %373 = vmatpush1.xpose.msra.mxu0 %v372
    %374 = vmatprep.subr.mxu0 0.0
    %v375 = vand.u32 %v74, 4294901760
    %v376 = vsub.f32 %v74, %v375
    %377 = vmatpush1.xpose.msra.mxu0 %v376
    %378 = vmatprep.subr.mxu0 0.0
    %v379 = vand.u32 %v77, 4294901760
    %v380 = vsub.f32 %v77, %v379
    %381 = vmatpush1.xpose.msra.mxu0 %v380
    %382 = vmatprep.subr.mxu0 0.0
    %v383 = vand.u32 %v80, 4294901760
    %v384 = vsub.f32 %v80, %v383
    %385 = vmatpush1.xpose.msra.mxu0 %v384
    %386 = vmatprep.subr.mxu0 0.0
    %v387 = vand.u32 %v83, 4294901760
    %v388 = vsub.f32 %v83, %v387
    %389 = vmatpush1.xpose.msra.mxu0 %v388
    %390 = vmatprep.subr.mxu0 0.0
    %v391 = vand.u32 %v86, 4294901760
    %v392 = vsub.f32 %v86, %v391
    %393 = vmatpush1.xpose.msra.mxu0 %v392
    %394 = vmatprep.subr.mxu0 0.0
    %395 = vmatpush1.xpose.msra.mxu0 0.0
    %396 = vmatprep.subr.mxu0 0.0
    %397 = vmatpush1.xpose.msra.mxu0 0.0
    %398 = vmatprep.subr.mxu0 0.0
    %399 = vmatpush1.xpose.msra.mxu0 0.0
    %400 = vmatprep.subr.mxu0 0.0
    %401 = vmatpush1.xpose.msra.mxu0 0.0
    %402 = vmatprep.subr.mxu0 0.0
    %403 = vmatpush1.xpose.msra.mxu0 0.0
    %404 = vmatprep.subr.mxu0 0.0
    %405 = vmatpush1.xpose.msra.mxu0 0.0
    %406 = vmatprep.subr.mxu0 0.0
    %407 = vmatpush1.xpose.msra.mxu0 0.0
    %408 = vmatprep.subr.mxu0 0.0
    %409 = vmatpush1.xpose.msra.mxu0 0.0
    %410 = vmatprep.subr.mxu0 0.0
    %411 = vmatpush1.xpose.msra.mxu0 0.0
    %412 = vmatprep.subr.mxu0 0.0
    %413 = vmatpush1.xpose.msra.mxu0 0.0
    %414 = vmatprep.subr.mxu0 0.0
    %415 = vmatpush1.xpose.msra.mxu0 0.0
    %416 = vmatprep.subr.mxu0 0.0
    %417 = vmatpush1.xpose.msra.mxu0 0.0
    %418 = vmatprep.subr.mxu0 0.0
    %419 = vmatpush1.xpose.msra.mxu0 0.0
    %420 = vmatprep.subr.mxu0 0.0
    %421 = vmatpush1.xpose.msra.mxu0 0.0
    %422 = vmatprep.subr.mxu0 0.0
    %423 = vmatpush1.xpose.msra.mxu0 0.0
    %424 = vmatprep.subr.mxu0 0.0
    %425 = vmatpush1.xpose.msra.mxu0 0.0
    %426 = vmatprep.mubr.f32.mxu0 0.0
    %v427 = vand.u32 %v38, 4294901760
    %v428 = vsub.f32 %v38, %v427
    %429 = vmatmul.mubr.f32.gmra.mrb[0].mxu0 %v428
    %v430 = vpop.f32.mrb[0].mxu0
    %v431 = vadd.f32 %v327, %v430
    %v432 = vpop.f32.mrb[0].mxu0
    %433 = vdwg.mxu0
    %434 = vmatprep.subr.mxu0 0.0
    %v435 = vand.u32 %v41, 4294901760
    %436 = vmatpush1.xpose.msra.mxu0 %v435
    %437 = vmatprep.subr.mxu0 0.0
    %v438 = vand.u32 %v44, 4294901760
    %439 = vmatpush1.xpose.msra.mxu0 %v438
    %440 = vmatprep.subr.mxu0 0.0
    %v441 = vand.u32 %v47, 4294901760
    %442 = vmatpush1.xpose.msra.mxu0 %v441
    %443 = vmatprep.subr.mxu0 0.0
    %v444 = vand.u32 %v50, 4294901760
    %445 = vmatpush1.xpose.msra.mxu0 %v444
    %446 = vmatprep.subr.mxu0 0.0
    %v447 = vand.u32 %v53, 4294901760
    %448 = vmatpush1.xpose.msra.mxu0 %v447
    %449 = vmatprep.subr.mxu0 0.0
    %v450 = vand.u32 %v56, 4294901760
    %451 = vmatpush1.xpose.msra.mxu0 %v450
    %452 = vmatprep.subr.mxu0 0.0
    %v453 = vand.u32 %v59, 4294901760
    %454 = vmatpush1.xpose.msra.mxu0 %v453
    %455 = vmatprep.subr.mxu0 0.0
    %v456 = vand.u32 %v62, 4294901760
    %457 = vmatpush1.xpose.msra.mxu0 %v456
    %458 = vmatprep.subr.mxu0 0.0
    %v459 = vand.u32 %v65, 4294901760
    %460 = vmatpush1.xpose.msra.mxu0 %v459
    %461 = vmatprep.subr.mxu0 0.0
    %v462 = vand.u32 %v68, 4294901760
    %463 = vmatpush1.xpose.msra.mxu0 %v462
    %464 = vmatprep.subr.mxu0 0.0
    %v465 = vand.u32 %v71, 4294901760
    %466 = vmatpush1.xpose.msra.mxu0 %v465
    %467 = vmatprep.subr.mxu0 0.0
    %v468 = vand.u32 %v74, 4294901760
    %469 = vmatpush1.xpose.msra.mxu0 %v468
    %470 = vmatprep.subr.mxu0 0.0
    %v471 = vand.u32 %v77, 4294901760
    %472 = vmatpush1.xpose.msra.mxu0 %v471
    %473 = vmatprep.subr.mxu0 0.0
    %v474 = vand.u32 %v80, 4294901760
    %475 = vmatpush1.xpose.msra.mxu0 %v474
    %476 = vmatprep.subr.mxu0 0.0
    %v477 = vand.u32 %v83, 4294901760
    %478 = vmatpush1.xpose.msra.mxu0 %v477
    %479 = vmatprep.subr.mxu0 0.0
    %v480 = vand.u32 %v86, 4294901760
    %481 = vmatpush1.xpose.msra.mxu0 %v480
    %482 = vmatprep.subr.mxu0 0.0
    %483 = vmatpush1.xpose.msra.mxu0 0.0
    %484 = vmatprep.subr.mxu0 0.0
    %485 = vmatpush1.xpose.msra.mxu0 0.0
    %486 = vmatprep.subr.mxu0 0.0
    %487 = vmatpush1.xpose.msra.mxu0 0.0
    %488 = vmatprep.subr.mxu0 0.0
    %489 = vmatpush1.xpose.msra.mxu0 0.0
    %490 = vmatprep.subr.mxu0 0.0
    %491 = vmatpush1.xpose.msra.mxu0 0.0
    %492 = vmatprep.subr.mxu0 0.0
    %493 = vmatpush1.xpose.msra.mxu0 0.0
    %494 = vmatprep.subr.mxu0 0.0
    %495 = vmatpush1.xpose.msra.mxu0 0.0
    %496 = vmatprep.subr.mxu0 0.0
    %497 = vmatpush1.xpose.msra.mxu0 0.0
    %498 = vmatprep.subr.mxu0 0.0
    %499 = vmatpush1.xpose.msra.mxu0 0.0
    %500 = vmatprep.subr.mxu0 0.0
    %501 = vmatpush1.xpose.msra.mxu0 0.0
    %502 = vmatprep.subr.mxu0 0.0
    %503 = vmatpush1.xpose.msra.mxu0 0.0
    %504 = vmatprep.subr.mxu0 0.0
    %505 = vmatpush1.xpose.msra.mxu0 0.0
    %506 = vmatprep.subr.mxu0 0.0
    %507 = vmatpush1.xpose.msra.mxu0 0.0
    %508 = vmatprep.subr.mxu0 0.0
    %509 = vmatpush1.xpose.msra.mxu0 0.0
    %510 = vmatprep.subr.mxu0 0.0
    %511 = vmatpush1.xpose.msra.mxu0 0.0
    %512 = vmatprep.subr.mxu0 0.0
    %513 = vmatpush1.xpose.msra.mxu0 0.0
    %514 = vmatprep.mubr.f32.mxu0 0.0
    %v515 = vand.u32 %v38, 4294901760
    %v516 = vsub.f32 %v38, %v515
    %v517 = vand.u32 %v516, 4294901760
    %518 = vmatmul.mubr.f32.gmra.mrb[0].mxu0 %v517
    %v519 = vpop.f32.mrb[0].mxu0
    %v520 = vadd.f32 %v431, %v519
    %v521 = vpop.f32.mrb[0].mxu0
    %522 = vdwg.mxu0
    %523 = vmatprep.subr.mxu0 0.0
    %v524 = vand.u32 %v41, 4294901760
    %v525 = vsub.f32 %v41, %v524
    %v526 = vand.u32 %v525, 4294901760
    %527 = vmatpush1.xpose.msra.mxu0 %v526
    %528 = vmatprep.subr.mxu0 0.0
    %v529 = vand.u32 %v44, 4294901760
    %v530 = vsub.f32 %v44, %v529
    %v531 = vand.u32 %v530, 4294901760
    %532 = vmatpush1.xpose.msra.mxu0 %v531
    %533 = vmatprep.subr.mxu0 0.0
    %v534 = vand.u32 %v47, 4294901760
    %v535 = vsub.f32 %v47, %v534
    %v536 = vand.u32 %v535, 4294901760
    %537 = vmatpush1.xpose.msra.mxu0 %v536
    %538 = vmatprep.subr.mxu0 0.0
    %v539 = vand.u32 %v50, 4294901760
    %v540 = vsub.f32 %v50, %v539
    %v541 = vand.u32 %v540, 4294901760
    %542 = vmatpush1.xpose.msra.mxu0 %v541
    %543 = vmatprep.subr.mxu0 0.0
    %v544 = vand.u32 %v53, 4294901760
    %v545 = vsub.f32 %v53, %v544
    %v546 = vand.u32 %v545, 4294901760
    %547 = vmatpush1.xpose.msra.mxu0 %v546
    %548 = vmatprep.subr.mxu0 0.0
    %v549 = vand.u32 %v56, 4294901760
    %v550 = vsub.f32 %v56, %v549
    %v551 = vand.u32 %v550, 4294901760
    %552 = vmatpush1.xpose.msra.mxu0 %v551
    %553 = vmatprep.subr.mxu0 0.0
    %v554 = vand.u32 %v59, 4294901760
    %v555 = vsub.f32 %v59, %v554
    %v556 = vand.u32 %v555, 4294901760
    %557 = vmatpush1.xpose.msra.mxu0 %v556
    %558 = vmatprep.subr.mxu0 0.0
    %v559 = vand.u32 %v62, 4294901760
    %v560 = vsub.f32 %v62, %v559
    %v561 = vand.u32 %v560, 4294901760
    %562 = vmatpush1.xpose.msra.mxu0 %v561
    %563 = vmatprep.subr.mxu0 0.0
    %v564 = vand.u32 %v65, 4294901760
    %v565 = vsub.f32 %v65, %v564
    %v566 = vand.u32 %v565, 4294901760
    %567 = vmatpush1.xpose.msra.mxu0 %v566
    %568 = vmatprep.subr.mxu0 0.0
    %v569 = vand.u32 %v68, 4294901760
    %v570 = vsub.f32 %v68, %v569
    %v571 = vand.u32 %v570, 4294901760
    %572 = vmatpush1.xpose.msra.mxu0 %v571
    %573 = vmatprep.subr.mxu0 0.0
    %v574 = vand.u32 %v71, 4294901760
    %v575 = vsub.f32 %v71, %v574
    %v576 = vand.u32 %v575, 4294901760
    %577 = vmatpush1.xpose.msra.mxu0 %v576
    %578 = vmatprep.subr.mxu0 0.0
    %v579 = vand.u32 %v74, 4294901760
    %v580 = vsub.f32 %v74, %v579
    %v581 = vand.u32 %v580, 4294901760
    %582 = vmatpush1.xpose.msra.mxu0 %v581
    %583 = vmatprep.subr.mxu0 0.0
    %v584 = vand.u32 %v77, 4294901760
    %v585 = vsub.f32 %v77, %v584
    %v586 = vand.u32 %v585, 4294901760
    %587 = vmatpush1.xpose.msra.mxu0 %v586
    %588 = vmatprep.subr.mxu0 0.0
    %v589 = vand.u32 %v80, 4294901760
    %v590 = vsub.f32 %v80, %v589
    %v591 = vand.u32 %v590, 4294901760
    %592 = vmatpush1.xpose.msra.mxu0 %v591
    %593 = vmatprep.subr.mxu0 0.0
    %v594 = vand.u32 %v83, 4294901760
    %v595 = vsub.f32 %v83, %v594
    %v596 = vand.u32 %v595, 4294901760
    %597 = vmatpush1.xpose.msra.mxu0 %v596
    %598 = vmatprep.subr.mxu0 0.0
    %v599 = vand.u32 %v86, 4294901760
    %v600 = vsub.f32 %v86, %v599
    %v601 = vand.u32 %v600, 4294901760
    %602 = vmatpush1.xpose.msra.mxu0 %v601
    %603 = vmatprep.subr.mxu0 0.0
    %604 = vmatpush1.xpose.msra.mxu0 0.0
    %605 = vmatprep.subr.mxu0 0.0
    %606 = vmatpush1.xpose.msra.mxu0 0.0
    %607 = vmatprep.subr.mxu0 0.0
    %608 = vmatpush1.xpose.msra.mxu0 0.0
    %609 = vmatprep.subr.mxu0 0.0
    %610 = vmatpush1.xpose.msra.mxu0 0.0
    %611 = vmatprep.subr.mxu0 0.0
    %612 = vmatpush1.xpose.msra.mxu0 0.0
    %613 = vmatprep.subr.mxu0 0.0
    %614 = vmatpush1.xpose.msra.mxu0 0.0
    %615 = vmatprep.subr.mxu0 0.0
    %616 = vmatpush1.xpose.msra.mxu0 0.0
    %617 = vmatprep.subr.mxu0 0.0
    %618 = vmatpush1.xpose.msra.mxu0 0.0
    %619 = vmatprep.subr.mxu0 0.0
    %620 = vmatpush1.xpose.msra.mxu0 0.0
    %621 = vmatprep.subr.mxu0 0.0
    %622 = vmatpush1.xpose.msra.mxu0 0.0
    %623 = vmatprep.subr.mxu0 0.0
    %624 = vmatpush1.xpose.msra.mxu0 0.0
    %625 = vmatprep.subr.mxu0 0.0
    %626 = vmatpush1.xpose.msra.mxu0 0.0
    %627 = vmatprep.subr.mxu0 0.0
    %628 = vmatpush1.xpose.msra.mxu0 0.0
    %629 = vmatprep.subr.mxu0 0.0
    %630 = vmatpush1.xpose.msra.mxu0 0.0
    %631 = vmatprep.subr.mxu0 0.0
    %632 = vmatpush1.xpose.msra.mxu0 0.0
    %633 = vmatprep.subr.mxu0 0.0
    %634 = vmatpush1.xpose.msra.mxu0 0.0
    %635 = vmatprep.mubr.f32.mxu0 0.0
    %v636 = vand.u32 %v38, 4294901760
    %637 = vmatmul.mubr.f32.gmra.mrb[0].mxu0 %v636
    %v638 = vpop.f32.mrb[0].mxu0
    %v639 = vadd.f32 %v520, %v638
    %v640 = vpop.f32.mrb[0].mxu0
    %641 = vdwg.mxu0
    %642 = vmatprep.subr.mxu0 0.0
    %v643 = vand.u32 %v41, 4294901760
    %644 = vmatpush1.xpose.msra.mxu0 %v643
    %645 = vmatprep.subr.mxu0 0.0
    %v646 = vand.u32 %v44, 4294901760
    %647 = vmatpush1.xpose.msra.mxu0 %v646
    %648 = vmatprep.subr.mxu0 0.0
    %v649 = vand.u32 %v47, 4294901760
    %650 = vmatpush1.xpose.msra.mxu0 %v649
    %651 = vmatprep.subr.mxu0 0.0
    %v652 = vand.u32 %v50, 4294901760
    %653 = vmatpush1.xpose.msra.mxu0 %v652
    %654 = vmatprep.subr.mxu0 0.0
    %v655 = vand.u32 %v53, 4294901760
    %656 = vmatpush1.xpose.msra.mxu0 %v655
    %657 = vmatprep.subr.mxu0 0.0
    %v658 = vand.u32 %v56, 4294901760
    %659 = vmatpush1.xpose.msra.mxu0 %v658
    %660 = vmatprep.subr.mxu0 0.0
    %v661 = vand.u32 %v59, 4294901760
    %662 = vmatpush1.xpose.msra.mxu0 %v661
    %663 = vmatprep.subr.mxu0 0.0
    %v664 = vand.u32 %v62, 4294901760
    %665 = vmatpush1.xpose.msra.mxu0 %v664
    %666 = vmatprep.subr.mxu0 0.0
    %v667 = vand.u32 %v65, 4294901760
    %668 = vmatpush1.xpose.msra.mxu0 %v667
    %669 = vmatprep.subr.mxu0 0.0
    %v670 = vand.u32 %v68, 4294901760
    %671 = vmatpush1.xpose.msra.mxu0 %v670
    %672 = vmatprep.subr.mxu0 0.0
    %v673 = vand.u32 %v71, 4294901760
    %674 = vmatpush1.xpose.msra.mxu0 %v673
    %675 = vmatprep.subr.mxu0 0.0
    %v676 = vand.u32 %v74, 4294901760
    %677 = vmatpush1.xpose.msra.mxu0 %v676
    %678 = vmatprep.subr.mxu0 0.0
    %v679 = vand.u32 %v77, 4294901760
    %680 = vmatpush1.xpose.msra.mxu0 %v679
    %681 = vmatprep.subr.mxu0 0.0
    %v682 = vand.u32 %v80, 4294901760
    %683 = vmatpush1.xpose.msra.mxu0 %v682
    %684 = vmatprep.subr.mxu0 0.0
    %v685 = vand.u32 %v83, 4294901760
    %686 = vmatpush1.xpose.msra.mxu0 %v685
    %687 = vmatprep.subr.mxu0 0.0
    %v688 = vand.u32 %v86, 4294901760
    %689 = vmatpush1.xpose.msra.mxu0 %v688
    %690 = vmatprep.subr.mxu0 0.0
    %691 = vmatpush1.xpose.msra.mxu0 0.0
    %692 = vmatprep.subr.mxu0 0.0
    %693 = vmatpush1.xpose.msra.mxu0 0.0
    %694 = vmatprep.subr.mxu0 0.0
    %695 = vmatpush1.xpose.msra.mxu0 0.0
    %696 = vmatprep.subr.mxu0 0.0
    %697 = vmatpush1.xpose.msra.mxu0 0.0
    %698 = vmatprep.subr.mxu0 0.0
    %699 = vmatpush1.xpose.msra.mxu0 0.0
    %700 = vmatprep.subr.mxu0 0.0
    %701 = vmatpush1.xpose.msra.mxu0 0.0
    %702 = vmatprep.subr.mxu0 0.0
    %703 = vmatpush1.xpose.msra.mxu0 0.0
    %704 = vmatprep.subr.mxu0 0.0
    %705 = vmatpush1.xpose.msra.mxu0 0.0
    %706 = vmatprep.subr.mxu0 0.0
    %707 = vmatpush1.xpose.msra.mxu0 0.0
    %708 = vmatprep.subr.mxu0 0.0
    %709 = vmatpush1.xpose.msra.mxu0 0.0
    %710 = vmatprep.subr.mxu0 0.0
    %711 = vmatpush1.xpose.msra.mxu0 0.0
    %712 = vmatprep.subr.mxu0 0.0
    %713 = vmatpush1.xpose.msra.mxu0 0.0
    %714 = vmatprep.subr.mxu0 0.0
    %715 = vmatpush1.xpose.msra.mxu0 0.0
    %716 = vmatprep.subr.mxu0 0.0
    %717 = vmatpush1.xpose.msra.mxu0 0.0
    %718 = vmatprep.subr.mxu0 0.0
    %719 = vmatpush1.xpose.msra.mxu0 0.0
    %720 = vmatprep.subr.mxu0 0.0
    %721 = vmatpush1.xpose.msra.mxu0 0.0
    %722 = vmatprep.mubr.f32.mxu0 0.0
    %v723 = vand.u32 %v38, 4294901760
    %724 = vmatmul.mubr.f32.gmra.mrb[0].mxu0 %v723
    %v725 = vpop.f32.mrb[0].mxu0
    %v726 = vadd.f32 %v639, %v725
    %v727 = vpop.f32.mrb[0].mxu0
    %728 = vdwg.mxu0
    %v729 = vmax.f32 %v726, 0.0
    %v730 = vld [vmem:[%s2] sm:$0x3]
    %732 = vset.pattern.permute.xlu0 5
    %733 = vperm.xlu0 %732, %v730
    %v734 = vpop.permute.xlu0 %733
    %vm736 = vcmask 39936
    %v737 = vsel %vm736, %v730, 0
    %vm739 = vcmask 1044480
    %v741 = vsel %vm739, %v729, 0
    %743 = vmatprep.subr.mxu0 0.0
    %v744 = vand.u32 %v741, 4294901760
    %745 = vmatpush1.msra.mxu0 %v744
    %746 = vmatprep.subr.mxu0 0.0
    %747 = vmatpush1.msra.mxu0 0.0
    %748 = vmatprep.subr.mxu0 0.0
    %749 = vmatpush1.msra.mxu0 0.0
    %750 = vmatprep.subr.mxu0 0.0
    %751 = vmatpush1.msra.mxu0 0.0
    %752 = vmatprep.subr.mxu0 0.0
    %753 = vmatpush1.msra.mxu0 0.0
    %754 = vmatprep.subr.mxu0 0.0
    %755 = vmatpush1.msra.mxu0 0.0
    %756 = vmatprep.subr.mxu0 0.0
    %757 = vmatpush1.msra.mxu0 0.0
    %758 = vmatprep.subr.mxu0 0.0
    %759 = vmatpush1.msra.mxu0 0.0
    %760 = vmatprep.subr.mxu0 0.0
    %761 = vmatpush1.msra.mxu0 0.0
    %762 = vmatprep.subr.mxu0 0.0
    %763 = vmatpush1.msra.mxu0 0.0
    %764 = vmatprep.subr.mxu0 0.0
    %765 = vmatpush1.msra.mxu0 0.0
    %766 = vmatprep.subr.mxu0 0.0
    %767 = vmatpush1.msra.mxu0 0.0
    %768 = vmatprep.subr.mxu0 0.0
    %769 = vmatpush1.msra.mxu0 0.0
    %770 = vmatprep.subr.mxu0 0.0
    %771 = vmatpush1.msra.mxu0 0.0
    %772 = vmatprep.subr.mxu0 0.0
    %773 = vmatpush1.msra.mxu0 0.0
    %774 = vmatprep.subr.mxu0 0.0
    %775 = vmatpush1.msra.mxu0 0.0
    %776 = vmatprep.subr.mxu0 0.0
    %777 = vmatpush1.msra.mxu0 0.0
    %778 = vmatprep.subr.mxu0 0.0
    %779 = vmatpush1.msra.mxu0 0.0
    %780 = vmatprep.subr.mxu0 0.0
    %781 = vmatpush1.msra.mxu0 0.0
    %782 = vmatprep.subr.mxu0 0.0
    %783 = vmatpush1.msra.mxu0 0.0
    %784 = vmatprep.subr.mxu0 0.0
    %785 = vmatpush1.msra.mxu0 0.0
    %786 = vmatprep.subr.mxu0 0.0
    %787 = vmatpush1.msra.mxu0 0.0
    %788 = vmatprep.subr.mxu0 0.0
    %789 = vmatpush1.msra.mxu0 0.0
    %790 = vmatprep.subr.mxu0 0.0
    %791 = vmatpush1.msra.mxu0 0.0
    %792 = vmatprep.subr.mxu0 0.0
    %793 = vmatpush1.msra.mxu0 0.0
    %794 = vmatprep.subr.mxu0 0.0
    %795 = vmatpush1.msra.mxu0 0.0
    %796 = vmatprep.subr.mxu0 0.0
    %797 = vmatpush1.msra.mxu0 0.0
    %798 = vmatprep.subr.mxu0 0.0
    %799 = vmatpush1.msra.mxu0 0.0
    %800 = vmatprep.subr.mxu0 0.0
    %801 = vmatpush1.msra.mxu0 0.0
    %802 = vmatprep.subr.mxu0 0.0
    %803 = vmatpush1.msra.mxu0 0.0
    %804 = vmatprep.subr.mxu0 0.0
    %805 = vmatpush1.msra.mxu0 0.0
    %806 = vmatprep.subr.mxu0 0.0
    %807 = vmatpush1.msra.mxu0 0.0
    %808 = vmatprep.mubr.f32.mxu0 0.0
    %v809 = vand.u32 %v737, 4294901760
    %v810 = vsub.f32 %v737, %v809
    %v811 = vand.u32 %v810, 4294901760
    %v812 = vsub.f32 %v810, %v811
    %v813 = vand.u32 %v812, 4294901760
    %814 = vmatmul.mubr.f32.gmra.mrb[0].mxu0 %v813
    %v815 = vpop.f32.mrb[0].mxu0
    %v816 = vadd.f32 %v734, %v815
    %v817 = vpop.f32.mrb[0].mxu0
    %818 = vdwg.mxu0
    %819 = vmatprep.subr.mxu0 0.0
    %v820 = vand.u32 %v741, 4294901760
    %v821 = vsub.f32 %v741, %v820
    %v822 = vand.u32 %v821, 4294901760
    %v823 = vsub.f32 %v821, %v822
    %v824 = vand.u32 %v823, 4294901760
    %825 = vmatpush1.msra.mxu0 %v824
    %826 = vmatprep.subr.mxu0 0.0
    %827 = vmatpush1.msra.mxu0 0.0
    %828 = vmatprep.subr.mxu0 0.0
    %829 = vmatpush1.msra.mxu0 0.0
    %830 = vmatprep.subr.mxu0 0.0
    %831 = vmatpush1.msra.mxu0 0.0
    %832 = vmatprep.subr.mxu0 0.0
    %833 = vmatpush1.msra.mxu0 0.0
    %834 = vmatprep.subr.mxu0 0.0
    %835 = vmatpush1.msra.mxu0 0.0
    %836 = vmatprep.subr.mxu0 0.0
    %837 = vmatpush1.msra.mxu0 0.0
    %838 = vmatprep.subr.mxu0 0.0
    %839 = vmatpush1.msra.mxu0 0.0
    %840 = vmatprep.subr.mxu0 0.0
    %841 = vmatpush1.msra.mxu0 0.0
    %842 = vmatprep.subr.mxu0 0.0
    %843 = vmatpush1.msra.mxu0 0.0
    %844 = vmatprep.subr.mxu0 0.0
    %845 = vmatpush1.msra.mxu0 0.0
    %846 = vmatprep.subr.mxu0 0.0
    %847 = vmatpush1.msra.mxu0 0.0
    %848 = vmatprep.subr.mxu0 0.0
    %849 = vmatpush1.msra.mxu0 0.0
    %850 = vmatprep.subr.mxu0 0.0
    %851 = vmatpush1.msra.mxu0 0.0
    %852 = vmatprep.subr.mxu0 0.0
    %853 = vmatpush1.msra.mxu0 0.0
    %854 = vmatprep.subr.mxu0 0.0
    %855 = vmatpush1.msra.mxu0 0.0
    %856 = vmatprep.subr.mxu0 0.0
    %857 = vmatpush1.msra.mxu0 0.0
    %858 = vmatprep.subr.mxu0 0.0
    %859 = vmatpush1.msra.mxu0 0.0
    %860 = vmatprep.subr.mxu0 0.0
    %861 = vmatpush1.msra.mxu0 0.0
    %862 = vmatprep.subr.mxu0 0.0
    %863 = vmatpush1.msra.mxu0 0.0
    %864 = vmatprep.subr.mxu0 0.0
    %865 = vmatpush1.msra.mxu0 0.0
    %866 = vmatprep.subr.mxu0 0.0
    %867 = vmatpush1.msra.mxu0 0.0
    %868 = vmatprep.subr.mxu0 0.0
    %869 = vmatpush1.msra.mxu0 0.0
    %870 = vmatprep.subr.mxu0 0.0
    %871 = vmatpush1.msra.mxu0 0.0
    %872 = vmatprep.subr.mxu0 0.0
    %873 = vmatpush1.msra.mxu0 0.0
    %874 = vmatprep.subr.mxu0 0.0
    %875 = vmatpush1.msra.mxu0 0.0
    %876 = vmatprep.subr.mxu0 0.0
    %877 = vmatpush1.msra.mxu0 0.0
    %878 = vmatprep.subr.mxu0 0.0
    %879 = vmatpush1.msra.mxu0 0.0
    %880 = vmatprep.subr.mxu0 0.0
    %881 = vmatpush1.msra.mxu0 0.0
    %882 = vmatprep.subr.mxu0 0.0
    %883 = vmatpush1.msra.mxu0 0.0
    %884 = vmatprep.subr.mxu0 0.0
    %885 = vmatpush1.msra.mxu0 0.0
    %886 = vmatprep.subr.mxu0 0.0
    %887 = vmatpush1.msra.mxu0 0.0
    %888 = vmatprep.mubr.f32.mxu0 0.0
    %v889 = vand.u32 %v737, 4294901760
    %890 = vmatmul.mubr.f32.gmra.mrb[0].mxu0 %v889
    %v891 = vpop.f32.mrb[0].mxu0
    %v892 = vadd.f32 %v816, %v891
    %v893 = vpop.f32.mrb[0].mxu0
    %894 = vdwg.mxu0
    %895 = vmatprep.subr.mxu0 0.0
    %v896 = vand.u32 %v741, 4294901760
    %v897 = vsub.f32 %v741, %v896
    %898 = vmatpush1.msra.mxu0 %v897
    %899 = vmatprep.subr.mxu0 0.0
    %900 = vmatpush1.msra.mxu0 0.0
    %901 = vmatprep.subr.mxu0 0.0
    %902 = vmatpush1.msra.mxu0 0.0
    %903 = vmatprep.subr.mxu0 0.0
    %904 = vmatpush1.msra.mxu0 0.0
    %905 = vmatprep.subr.mxu0 0.0
    %906 = vmatpush1.msra.mxu0 0.0
    %907 = vmatprep.subr.mxu0 0.0
    %908 = vmatpush1.msra.mxu0 0.0
    %909 = vmatprep.subr.mxu0 0.0
    %910 = vmatpush1.msra.mxu0 0.0
    %911 = vmatprep.subr.mxu0 0.0
    %912 = vmatpush1.msra.mxu0 0.0
    %913 = vmatprep.subr.mxu0 0.0
    %914 = vmatpush1.msra.mxu0 0.0
    %915 = vmatprep.subr.mxu0 0.0
    %916 = vmatpush1.msra.mxu0 0.0
    %917 = vmatprep.subr.mxu0 0.0
    %918 = vmatpush1.msra.mxu0 0.0
    %919 = vmatprep.subr.mxu0 0.0
    %920 = vmatpush1.msra.mxu0 0.0
    %921 = vmatprep.subr.mxu0 0.0
    %922 = vmatpush1.msra.mxu0 0.0
    %923 = vmatprep.subr.mxu0 0.0
    %924 = vmatpush1.msra.mxu0 0.0
    %925 = vmatprep.subr.mxu0 0.0
    %926 = vmatpush1.msra.mxu0 0.0
    %927 = vmatprep.subr.mxu0 0.0
    %928 = vmatpush1.msra.mxu0 0.0
    %929 = vmatprep.subr.mxu0 0.0
    %930 = vmatpush1.msra.mxu0 0.0
    %931 = vmatprep.subr.mxu0 0.0
    %932 = vmatpush1.msra.mxu0 0.0
    %933 = vmatprep.subr.mxu0 0.0
    %934 = vmatpush1.msra.mxu0 0.0
    %935 = vmatprep.subr.mxu0 0.0
    %936 = vmatpush1.msra.mxu0 0.0
    %937 = vmatprep.subr.mxu0 0.0
    %938 = vmatpush1.msra.mxu0 0.0
    %939 = vmatprep.subr.mxu0 0.0
    %940 = vmatpush1.msra.mxu0 0.0
    %941 = vmatprep.subr.mxu0 0.0
    %942 = vmatpush1.msra.mxu0 0.0
    %943 = vmatprep.subr.mxu0 0.0
    %944 = vmatpush1.msra.mxu0 0.0
    %945 = vmatprep.subr.mxu0 0.0
    %946 = vmatpush1.msra.mxu0 0.0
    %947 = vmatprep.subr.mxu0 0.0
    %948 = vmatpush1.msra.mxu0 0.0
    %949 = vmatprep.subr.mxu0 0.0
    %950 = vmatpush1.msra.mxu0 0.0
    %951 = vmatprep.subr.mxu0 0.0
    %952 = vmatpush1.msra.mxu0 0.0
    %953 = vmatprep.subr.mxu0 0.0
    %954 = vmatpush1.msra.mxu0 0.0
    %955 = vmatprep.subr.mxu0 0.0
    %956 = vmatpush1.msra.mxu0 0.0
    %957 = vmatprep.subr.mxu0 0.0
    %958 = vmatpush1.msra.mxu0 0.0
    %959 = vmatprep.subr.mxu0 0.0
    %960 = vmatpush1.msra.mxu0 0.0
    %961 = vmatprep.mubr.f32.mxu0 0.0
    %v962 = vand.u32 %v737, 4294901760
    %v963 = vsub.f32 %v737, %v962
    %964 = vmatmul.mubr.f32.gmra.mrb[0].mxu0 %v963
    %v965 = vpop.f32.mrb[0].mxu0
    %v966 = vadd.f32 %v892, %v965
    %v967 = vpop.f32.mrb[0].mxu0
    %968 = vdwg.mxu0
    %969 = vmatprep.subr.mxu0 0.0
    %v970 = vand.u32 %v741, 4294901760
    %971 = vmatpush1.msra.mxu0 %v970
    %972 = vmatprep.subr.mxu0 0.0
    %973 = vmatpush1.msra.mxu0 0.0
    %974 = vmatprep.subr.mxu0 0.0
    %975 = vmatpush1.msra.mxu0 0.0
    %976 = vmatprep.subr.mxu0 0.0
    %977 = vmatpush1.msra.mxu0 0.0
    %978 = vmatprep.subr.mxu0 0.0
    %979 = vmatpush1.msra.mxu0 0.0
    %980 = vmatprep.subr.mxu0 0.0
    %981 = vmatpush1.msra.mxu0 0.0
    %982 = vmatprep.subr.mxu0 0.0
    %983 = vmatpush1.msra.mxu0 0.0
    %984 = vmatprep.subr.mxu0 0.0
    %985 = vmatpush1.msra.mxu0 0.0
    %986 = vmatprep.subr.mxu0 0.0
    %987 = vmatpush1.msra.mxu0 0.0
    %988 = vmatprep.subr.mxu0 0.0
    %989 = vmatpush1.msra.mxu0 0.0
    %990 = vmatprep.subr.mxu0 0.0
    %991 = vmatpush1.msra.mxu0 0.0
    %992 = vmatprep.subr.mxu0 0.0
    %993 = vmatpush1.msra.mxu0 0.0
    %994 = vmatprep.subr.mxu0 0.0
    %995 = vmatpush1.msra.mxu0 0.0
    %996 = vmatprep.subr.mxu0 0.0
    %997 = vmatpush1.msra.mxu0 0.0
    %998 = vmatprep.subr.mxu0 0.0
    %999 = vmatpush1.msra.mxu0 0.0
    %1000 = vmatprep.subr.mxu0 0.0
    %1001 = vmatpush1.msra.mxu0 0.0
    %1002 = vmatprep.subr.mxu0 0.0
    %1003 = vmatpush1.msra.mxu0 0.0
    %1004 = vmatprep.subr.mxu0 0.0
    %1005 = vmatpush1.msra.mxu0 0.0
    %1006 = vmatprep.subr.mxu0 0.0
    %1007 = vmatpush1.msra.mxu0 0.0
    %1008 = vmatprep.subr.mxu0 0.0
    %1009 = vmatpush1.msra.mxu0 0.0
    %1010 = vmatprep.subr.mxu0 0.0
    %1011 = vmatpush1.msra.mxu0 0.0
    %1012 = vmatprep.subr.mxu0 0.0
    %1013 = vmatpush1.msra.mxu0 0.0
    %1014 = vmatprep.subr.mxu0 0.0
    %1015 = vmatpush1.msra.mxu0 0.0
    %1016 = vmatprep.subr.mxu0 0.0
    %1017 = vmatpush1.msra.mxu0 0.0
    %1018 = vmatprep.subr.mxu0 0.0
    %1019 = vmatpush1.msra.mxu0 0.0
    %1020 = vmatprep.subr.mxu0 0.0
    %1021 = vmatpush1.msra.mxu0 0.0
    %1022 = vmatprep.subr.mxu0 0.0
    %1023 = vmatpush1.msra.mxu0 0.0
    %1024 = vmatprep.subr.mxu0 0.0
    %1025 = vmatpush1.msra.mxu0 0.0
    %1026 = vmatprep.subr.mxu0 0.0
    %1027 = vmatpush1.msra.mxu0 0.0
    %1028 = vmatprep.subr.mxu0 0.0
    %1029 = vmatpush1.msra.mxu0 0.0
    %1030 = vmatprep.subr.mxu0 0.0
    %1031 = vmatpush1.msra.mxu0 0.0
    %1032 = vmatprep.subr.mxu0 0.0
    %1033 = vmatpush1.msra.mxu0 0.0
    %1034 = vmatprep.mubr.f32.mxu0 0.0
    %v1035 = vand.u32 %v737, 4294901760
    %v1036 = vsub.f32 %v737, %v1035
    %v1037 = vand.u32 %v1036, 4294901760
    %1038 = vmatmul.mubr.f32.gmra.mrb[0].mxu0 %v1037
    %v1039 = vpop.f32.mrb[0].mxu0
    %v1040 = vadd.f32 %v966, %v1039
    %v1041 = vpop.f32.mrb[0].mxu0
    %1042 = vdwg.mxu0
    %1043 = vmatprep.subr.mxu0 0.0
    %v1044 = vand.u32 %v741, 4294901760
    %v1045 = vsub.f32 %v741, %v1044
    %v1046 = vand.u32 %v1045, 4294901760
    %1047 = vmatpush1.msra.mxu0 %v1046
    %1048 = vmatprep.subr.mxu0 0.0
    %1049 = vmatpush1.msra.mxu0 0.0
    %1050 = vmatprep.subr.mxu0 0.0
    %1051 = vmatpush1.msra.mxu0 0.0
    %1052 = vmatprep.subr.mxu0 0.0
    %1053 = vmatpush1.msra.mxu0 0.0
    %1054 = vmatprep.subr.mxu0 0.0
    %1055 = vmatpush1.msra.mxu0 0.0
    %1056 = vmatprep.subr.mxu0 0.0
    %1057 = vmatpush1.msra.mxu0 0.0
    %1058 = vmatprep.subr.mxu0 0.0
    %1059 = vmatpush1.msra.mxu0 0.0
    %1060 = vmatprep.subr.mxu0 0.0
    %1061 = vmatpush1.msra.mxu0 0.0
    %1062 = vmatprep.subr.mxu0 0.0
    %1063 = vmatpush1.msra.mxu0 0.0
    %1064 = vmatprep.subr.mxu0 0.0
    %1065 = vmatpush1.msra.mxu0 0.0
    %1066 = vmatprep.subr.mxu0 0.0
    %1067 = vmatpush1.msra.mxu0 0.0
    %1068 = vmatprep.subr.mxu0 0.0
    %1069 = vmatpush1.msra.mxu0 0.0
    %1070 = vmatprep.subr.mxu0 0.0
    %1071 = vmatpush1.msra.mxu0 0.0
    %1072 = vmatprep.subr.mxu0 0.0
    %1073 = vmatpush1.msra.mxu0 0.0
    %1074 = vmatprep.subr.mxu0 0.0
    %1075 = vmatpush1.msra.mxu0 0.0
    %1076 = vmatprep.subr.mxu0 0.0
    %1077 = vmatpush1.msra.mxu0 0.0
    %1078 = vmatprep.subr.mxu0 0.0
    %1079 = vmatpush1.msra.mxu0 0.0
    %1080 = vmatprep.subr.mxu0 0.0
    %1081 = vmatpush1.msra.mxu0 0.0
    %1082 = vmatprep.subr.mxu0 0.0
    %1083 = vmatpush1.msra.mxu0 0.0
    %1084 = vmatprep.subr.mxu0 0.0
    %1085 = vmatpush1.msra.mxu0 0.0
    %1086 = vmatprep.subr.mxu0 0.0
    %1087 = vmatpush1.msra.mxu0 0.0
    %1088 = vmatprep.subr.mxu0 0.0
    %1089 = vmatpush1.msra.mxu0 0.0
    %1090 = vmatprep.subr.mxu0 0.0
    %1091 = vmatpush1.msra.mxu0 0.0
    %1092 = vmatprep.subr.mxu0 0.0
    %1093 = vmatpush1.msra.mxu0 0.0
    %1094 = vmatprep.subr.mxu0 0.0
    %1095 = vmatpush1.msra.mxu0 0.0
    %1096 = vmatprep.subr.mxu0 0.0
    %1097 = vmatpush1.msra.mxu0 0.0
    %1098 = vmatprep.subr.mxu0 0.0
    %1099 = vmatpush1.msra.mxu0 0.0
    %1100 = vmatprep.subr.mxu0 0.0
    %1101 = vmatpush1.msra.mxu0 0.0
    %1102 = vmatprep.subr.mxu0 0.0
    %1103 = vmatpush1.msra.mxu0 0.0
    %1104 = vmatprep.subr.mxu0 0.0
    %1105 = vmatpush1.msra.mxu0 0.0
    %1106 = vmatprep.subr.mxu0 0.0
    %1107 = vmatpush1.msra.mxu0 0.0
    %1108 = vmatprep.subr.mxu0 0.0
    %1109 = vmatpush1.msra.mxu0 0.0
    %1110 = vmatprep.mubr.f32.mxu0 0.0
    %v1111 = vand.u32 %v737, 4294901760
    %1112 = vmatmul.mubr.f32.gmra.mrb[0].mxu0 %v1111
    %v1113 = vpop.f32.mrb[0].mxu0
    %v1114 = vadd.f32 %v1040, %v1113
    %v1115 = vpop.f32.mrb[0].mxu0
    %1116 = vdwg.mxu0
    %1117 = vmatprep.subr.mxu0 0.0
    %v1118 = vand.u32 %v741, 4294901760
    %1119 = vmatpush1.msra.mxu0 %v1118
    %1120 = vmatprep.subr.mxu0 0.0
    %1121 = vmatpush1.msra.mxu0 0.0
    %1122 = vmatprep.subr.mxu0 0.0
    %1123 = vmatpush1.msra.mxu0 0.0
    %1124 = vmatprep.subr.mxu0 0.0
    %1125 = vmatpush1.msra.mxu0 0.0
    %1126 = vmatprep.subr.mxu0 0.0
    %1127 = vmatpush1.msra.mxu0 0.0
    %1128 = vmatprep.subr.mxu0 0.0
    %1129 = vmatpush1.msra.mxu0 0.0
    %1130 = vmatprep.subr.mxu0 0.0
    %1131 = vmatpush1.msra.mxu0 0.0
    %1132 = vmatprep.subr.mxu0 0.0
    %1133 = vmatpush1.msra.mxu0 0.0
    %1134 = vmatprep.subr.mxu0 0.0
    %1135 = vmatpush1.msra.mxu0 0.0
    %1136 = vmatprep.subr.mxu0 0.0
    %1137 = vmatpush1.msra.mxu0 0.0
    %1138 = vmatprep.subr.mxu0 0.0
    %1139 = vmatpush1.msra.mxu0 0.0
    %1140 = vmatprep.subr.mxu0 0.0
    %1141 = vmatpush1.msra.mxu0 0.0
    %1142 = vmatprep.subr.mxu0 0.0
    %1143 = vmatpush1.msra.mxu0 0.0
    %1144 = vmatprep.subr.mxu0 0.0
    %1145 = vmatpush1.msra.mxu0 0.0
    %1146 = vmatprep.subr.mxu0 0.0
    %1147 = vmatpush1.msra.mxu0 0.0
    %1148 = vmatprep.subr.mxu0 0.0
    %1149 = vmatpush1.msra.mxu0 0.0
    %1150 = vmatprep.subr.mxu0 0.0
    %1151 = vmatpush1.msra.mxu0 0.0
    %1152 = vmatprep.subr.mxu0 0.0
    %1153 = vmatpush1.msra.mxu0 0.0
    %1154 = vmatprep.subr.mxu0 0.0
    %1155 = vmatpush1.msra.mxu0 0.0
    %1156 = vmatprep.subr.mxu0 0.0
    %1157 = vmatpush1.msra.mxu0 0.0
    %1158 = vmatprep.subr.mxu0 0.0
    %1159 = vmatpush1.msra.mxu0 0.0
    %1160 = vmatprep.subr.mxu0 0.0
    %1161 = vmatpush1.msra.mxu0 0.0
    %1162 = vmatprep.subr.mxu0 0.0
    %1163 = vmatpush1.msra.mxu0 0.0
    %1164 = vmatprep.subr.mxu0 0.0
    %1165 = vmatpush1.msra.mxu0 0.0
    %1166 = vmatprep.subr.mxu0 0.0
    %1167 = vmatpush1.msra.mxu0 0.0
    %1168 = vmatprep.subr.mxu0 0.0
    %1169 = vmatpush1.msra.mxu0 0.0
    %1170 = vmatprep.subr.mxu0 0.0
    %1171 = vmatpush1.msra.mxu0 0.0
    %1172 = vmatprep.subr.mxu0 0.0
    %1173 = vmatpush1.msra.mxu0 0.0
    %1174 = vmatprep.subr.mxu0 0.0
    %1175 = vmatpush1.msra.mxu0 0.0
    %1176 = vmatprep.subr.mxu0 0.0
    %1177 = vmatpush1.msra.mxu0 0.0
    %1178 = vmatprep.subr.mxu0 0.0
    %1179 = vmatpush1.msra.mxu0 0.0
    %1180 = vmatprep.subr.mxu0 0.0
    %1181 = vmatpush1.msra.mxu0 0.0
    %1182 = vmatprep.mubr.f32.mxu0 0.0
    %v1183 = vand.u32 %v737, 4294901760
    %1184 = vmatmul.mubr.f32.gmra.mrb[0].mxu0 %v1183
    %v1185 = vpop.f32.mrb[0].mxu0
    %v1186 = vadd.f32 %v1114, %v1185
    %v1187 = vpop.f32.mrb[0].mxu0
    %1188 = vdwg.mxu0
    %1189 = vst [vmem:[#allocation2] sm:$0x3] %v1186
    // Predicated region
    $region14: #{tpu_custom_call.1} parent=1 // pred_check
      _
    $region15: #{tpu_custom_call.1} parent=1 // pred_check_branch
      %1191 = sbr.rel (0) target = $region17
    $region16: #{tpu_custom_call.1} parent=1 // pred_region
      %s1193 = ssub.s32 32, 32
      %1194 = vsyncadd [#allocation3], %s1193
      %s1196 = sshll.u32 [#allocation2], 4
      %s1197 = int_to_ptr.vmem [resolvable:$true] %s1196
      %1199 = dma.vmem_to_hbm [thread:$0]  %s1197, 32, %s3, [#allocation3]
    $region17: #{tpu_custom_call.1} parent=1 // pred_fallthru
      _
    // Predicated region
    $region18: #{tpu_custom_call.1} parent=1 // pred_check
      _
    $region19: #{tpu_custom_call.1} parent=1 // pred_check_branch
      %1201 = sbr.rel (0) target = $region21
    $region20: #{tpu_custom_call.1} parent=1 // pred_region
      %1202 = dma.done [#allocation3], 32
    $region21: #{tpu_custom_call.1} parent=1 // pred_fallthru
      _
    %1203 = vsyncpa [#allocation3], 1

</llo_original>
